<compile_context>
chip_gen: v7x
topology: tpu7x:2x2x1
jax: 0.10.0
libtpu: 0.0.40
codegen_flags: <defaults>
</compile_context>

<pallas_src>
import jax
import jax.numpy as jnp
import numpy as np
from jax import lax
from jax.experimental import pallas as pl
from jax.experimental.pallas import tpu as pltpu

NUM_CHANNELS = 11
NUM_ACTIONS = 4
H = W = 4
P = H * W              # 16 spatial positions (row-major i*4+j)
C1, C2 = 16, 32        # conv output channels
HID = 64               # fc hidden
A_PAD = 128            # padded action dim for a lane-dense output store
NEG_BIG = -1e30        # bias for padded logit lanes -> exp underflows to exactly 0
TB_MAX = 512           # batch tile (multiple of 256 for v6e/v7x MXU, fits VMEM easily)


def _build_shift_matrices():
    # S[k, p, q] = 1 iff output position p=(i,j) reads input position q=(i+dy-1, j+dx-1), k=dy*3+dx
    S = np.zeros((9, P, P), dtype=np.float32)
    for dy in range(3):
        for dx in range(3):
            k = dy * 3 + dx
            for i in range(H):
                for j in range(W):
                    si, sj = i + dy - 1, j + dx - 1
                    if 0 <= si < H and 0 <= sj < W:
                        S[k, i * W + j, si * W + sj] = 1.0
    return S


def _round_up(x, m):
    return ((x + m - 1) // m) * m


def policy_kernel(x_ref, wc1_ref, bc1_ref, wc2_ref, bc2_ref,
                  wf1_ref, bf1_ref, wf2_ref, bf2_ref, out_ref):
    x = x_ref[...]                                                              # (TB, P*Cin)
    a1 = jnp.maximum(
        jnp.dot(x, wc1_ref[...], preferred_element_type=jnp.float32) + bc1_ref[...], 0.0)
    a2 = jnp.maximum(
        jnp.dot(a1, wc2_ref[...], preferred_element_type=jnp.float32) + bc2_ref[...], 0.0)
    h = jnp.maximum(
        jnp.dot(a2, wf1_ref[...], preferred_element_type=jnp.float32) + bf1_ref[...], 0.0)
    logits = jnp.dot(h, wf2_ref[...], preferred_element_type=jnp.float32) + bf2_ref[...]  # (TB, 128)
    m = jnp.max(logits, axis=-1, keepdims=True)
    e = jnp.exp(logits - m)                     # padded lanes: exp(-1e30 - m) == 0.0
    denom = jnp.sum(e, axis=-1, keepdims=True)
    out_ref[...] = e * pl.reciprocal(denom, approx=True)


def _prepare_weights(params):
    """Fold convs into dense matmul weights; pre-broadcast biases; pad action dim."""
    w1, b1, w2, b2, wl1, bl1, wl2, bl2 = params
    S = jnp.asarray(_build_shift_matrices())
    # conv weights (Cout, Cin, 3, 3) -> per-tap (9, Cin, Cout)
    w1k = jnp.transpose(w1, (2, 3, 1, 0)).reshape(9, NUM_CHANNELS, C1)
    w2k = jnp.transpose(w2, (2, 3, 1, 0)).reshape(9, C1, C2)
    # Dense conv matrices: Wc[q*Cin + cin, p*Cout + cout] = sum_k S[k,p,q] * wk[k,cin,cout]
    wc1 = jnp.einsum('kpq,kio->qipo', S, w1k).reshape(P * NUM_CHANNELS, P * C1)   # (176, 256)
    wc2 = jnp.einsum('kpq,kio->qipo', S, w2k).reshape(P * C1, P * C2)             # (256, 512)
    # Pre-broadcast conv biases over positions (layout p*Cout + cout)
    bc1 = jnp.tile(b1, P).reshape(1, P * C1)
    bc2 = jnp.tile(b2, P).reshape(1, P * C2)
    # torch flattens conv output channel-major (f = c*P + p); our layout is p*C2 + c
    wf1 = jnp.transpose(wl1.reshape(HID, C2, P), (2, 1, 0)).reshape(P * C2, HID)  # (512, 64)
    bf1 = bl1.reshape(1, HID)
    # Pad action dim 4 -> 128: zero weight columns, -1e30 bias so padded softmax lanes are 0
    wf2 = jnp.pad(wl2.T, ((0, 0), (0, A_PAD - NUM_ACTIONS)))                      # (64, 128)
    bf2 = jnp.concatenate(
        [bl2.astype(jnp.float32), jnp.full((A_PAD - NUM_ACTIONS,), NEG_BIG, jnp.float32)]
    ).reshape(1, A_PAD)
    return tuple(a.astype(jnp.float32) for a in (wc1, bc1, wc2, bc2, wf1, bf1, wf2, bf2))


def policy_forward(x_nchw, params):
    """Pallas forward. x_nchw: (B, 11, 4, 4) float32. Returns softmax probs, squeezed like torch."""
    B = x_nchw.shape[0]
    # NCHW -> (B, P*Cin) with flat index p*Cin + c
    x_flat = jnp.transpose(x_nchw.reshape(B, NUM_CHANNELS, P), (0, 2, 1)) \
                .reshape(B, P * NUM_CHANNELS).astype(jnp.float32)

    # batch tile: up to TB_MAX rows per grid step; pad B to a multiple of the tile
    tb = TB_MAX if B >= TB_MAX else _round_up(B, 8)
    b_pad = _round_up(B, tb)
    if b_pad != B:
        x_flat = jnp.pad(x_flat, ((0, b_pad - B), (0, 0)))

    weights = _prepare_weights(params)

    def const_spec(a):
        # constant index_map -> weight block stays VMEM-resident across grid steps
        return pl.BlockSpec(a.shape, lambda i: (0, 0))

    out = pl.pallas_call(
        policy_kernel,
        out_shape=jax.ShapeDtypeStruct((b_pad, A_PAD), jnp.float32),
        grid_spec=pltpu.PrefetchScalarGridSpec(
            num_scalar_prefetch=0,
            grid=(b_pad // tb,),
            in_specs=[pl.BlockSpec((tb, P * NUM_CHANNELS), lambda i: (i, 0))]
                     + [const_spec(w) for w in weights],
            out_specs=pl.BlockSpec((tb, A_PAD), lambda i: (i, 0)),
        ),
        compiler_params=pltpu.CompilerParams(dimension_semantics=("parallel",)),
    )(x_flat, *weights)

    probs = out[:B, :NUM_ACTIONS]          # drop batch padding + padded action lanes
    return jnp.squeeze(probs)              # matches torch .squeeze()


def ref_forward(x_nchw, params):
    """Pure-JAX reference of the PyTorch forward (float32)."""
    w1, b1, w2, b2, wl1, bl1, wl2, bl2 = params
    hp = lax.Precision.HIGHEST
    dn = ('NCHW', 'OIHW', 'NCHW')
    y = lax.conv_general_dilated(x_nchw, w1, (1, 1), ((1, 1), (1, 1)),
                                 dimension_numbers=dn, precision=hp)
    y = jnp.maximum(y + b1.reshape(1, C1, 1, 1), 0.0)
    y = lax.conv_general_dilated(y, w2, (1, 1), ((1, 1), (1, 1)),
                                 dimension_numbers=dn, precision=hp)
    y = jnp.maximum(y + b2.reshape(1, C2, 1, 1), 0.0)
    y = y.reshape(y.shape[0], -1)                               # (B, 512) channel-major, like torch
    y = jnp.maximum(jnp.dot(y, wl1.T, precision=hp) + bl1, 0.0)
    y = jnp.dot(y, wl2.T, precision=hp) + bl2
    return jnp.squeeze(jax.nn.softmax(y, axis=1))


if __name__ == "__main__":
    key = jax.random.PRNGKey(0)
    keys = jax.random.split(key, 10)

    def u(k, shape, fan_in):
        bound = 1.0 / np.sqrt(fan_in)
        return jax.random.uniform(k, shape, jnp.float32, -bound, bound)

    # Deterministic parameters, PyTorch shapes: Conv2d(11->16,3x3), Conv2d(16->32,3x3),
    # Linear(512->64), Linear(64->num_actions=4)
    params = (
        u(keys[0], (C1, NUM_CHANNELS, 3, 3), NUM_CHANNELS * 9),
        u(keys[1], (C1,), NUM_CHANNELS * 9),
        u(keys[2], (C2, C1, 3, 3), C1 * 9),
        u(keys[3], (C2,), C1 * 9),
        u(keys[4], (HID, C2 * P), C2 * P),
        u(keys[5], (HID,), C2 * P),
        u(keys[6], (NUM_ACTIONS, HID), HID),
        u(keys[7], (NUM_ACTIONS,), HID),
    )

    # small batch (module reshapes input to (-1, 11, 4, 4))
    x_small = jax.random.normal(keys[8], (2, NUM_CHANNELS, 4, 4), jnp.float32)
    out = jax.block_until_ready(policy_forward(x_small, params))
    ref = jax.block_until_ready(ref_forward(x_small, params))
    assert out.shape == (2, NUM_ACTIONS), out.shape
    assert float(jnp.max(jnp.abs(out - ref))) < 1e-3, (out, ref)

    # larger batch: exercises the batch-tiling path (grid > 1) and batch padding
    x_big = jax.random.normal(keys[9], (1037, NUM_CHANNELS, 4, 4), jnp.float32)
    out_b = jax.block_until_ready(policy_forward(x_big, params))
    ref_b = jax.block_until_ready(ref_forward(x_big, params))
    assert out_b.shape == (1037, NUM_ACTIONS), out_b.shape
    assert float(jnp.max(jnp.abs(out_b - ref_b))) < 1e-3

    print("KERNEL_OK")
</pallas_src>

<mosaic_0001>
module attributes {stable_mosaic.version = 11 : i64} {
  func.func @policy_kernel(%arg0: i32, %arg1: memref<8x176xf32, #tpu.memory_space<vmem>>, %arg2: memref<176x256xf32, #tpu.memory_space<vmem>>, %arg3: memref<1x256xf32, #tpu.memory_space<vmem>>, %arg4: memref<256x512xf32, #tpu.memory_space<vmem>>, %arg5: memref<1x512xf32, #tpu.memory_space<vmem>>, %arg6: memref<512x64xf32, #tpu.memory_space<vmem>>, %arg7: memref<1x64xf32, #tpu.memory_space<vmem>>, %arg8: memref<64x128xf32, #tpu.memory_space<vmem>>, %arg9: memref<1x128xf32, #tpu.memory_space<vmem>>, %arg10: memref<8x128xf32, #tpu.memory_space<vmem>>) attributes {dimension_semantics = [#tpu.dimension_semantics<parallel>], iteration_bounds = array<i64: 1>, scalar_prefetch = 0 : i64, scratch_operands = 0 : i64, tpu.core_type = #tpu.core_type<tc>, window_params = [{transform_indices = @transform_0, window_bounds = array<i64: 8, 176>}, {pipeline_mode = #tpu.pipeline_mode<synchronous>, transform_indices = @transform_1, window_bounds = array<i64: 176, 256>}, {pipeline_mode = #tpu.pipeline_mode<synchronous>, transform_indices = @transform_2, window_bounds = array<i64: 1, 256>}, {pipeline_mode = #tpu.pipeline_mode<synchronous>, transform_indices = @transform_3, window_bounds = array<i64: 256, 512>}, {pipeline_mode = #tpu.pipeline_mode<synchronous>, transform_indices = @transform_4, window_bounds = array<i64: 1, 512>}, {pipeline_mode = #tpu.pipeline_mode<synchronous>, transform_indices = @transform_5, window_bounds = array<i64: 512, 64>}, {pipeline_mode = #tpu.pipeline_mode<synchronous>, transform_indices = @transform_6, window_bounds = array<i64: 1, 64>}, {pipeline_mode = #tpu.pipeline_mode<synchronous>, transform_indices = @transform_7, window_bounds = array<i64: 64, 128>}, {pipeline_mode = #tpu.pipeline_mode<synchronous>, transform_indices = @transform_8, window_bounds = array<i64: 1, 128>}, {transform_indices = @transform_9, window_bounds = array<i64: 8, 128>}]} {
    %c0 = arith.constant 0 : index
    %c0_0 = arith.constant 0 : index
    %0 = vector.load %arg1[%c0, %c0_0] : memref<8x176xf32, #tpu.memory_space<vmem>>, vector<8x176xf32>
    %c0_1 = arith.constant 0 : index
    %c0_2 = arith.constant 0 : index
    %1 = vector.load %arg2[%c0_1, %c0_2] : memref<176x256xf32, #tpu.memory_space<vmem>>, vector<176x256xf32>
    %cst = arith.constant dense<0.000000e+00> : vector<8x256xf32>
    %2 = tpu.matmul %0, %1, %cst {dimension_numbers = #tpu.dot_dimension_numbers<[1], [0], [0], [1], [0, 0, 1, 1], [], []>} : vector<8x176xf32>, vector<176x256xf32>, vector<8x256xf32> -> vector<8x256xf32>
    %c0_3 = arith.constant 0 : index
    %c0_4 = arith.constant 0 : index
    %3 = vector.load %arg3[%c0_3, %c0_4] : memref<1x256xf32, #tpu.memory_space<vmem>>, vector<1x256xf32>
    %4 = vector.broadcast %3 : vector<1x256xf32> to vector<8x256xf32>
    %5 = arith.addf %2, %4 : vector<8x256xf32>
    %cst_5 = arith.constant 0.000000e+00 : f32
    %6 = vector.broadcast %cst_5 : f32 to vector<8x256xf32>
    %7 = arith.maximumf %5, %6 : vector<8x256xf32>
    %c0_6 = arith.constant 0 : index
    %c0_7 = arith.constant 0 : index
    %8 = vector.load %arg4[%c0_6, %c0_7] : memref<256x512xf32, #tpu.memory_space<vmem>>, vector<256x512xf32>
    %cst_8 = arith.constant dense<0.000000e+00> : vector<8x512xf32>
    %9 = tpu.matmul %7, %8, %cst_8 {dimension_numbers = #tpu.dot_dimension_numbers<[1], [0], [0], [1], [0, 0, 1, 1], [], []>} : vector<8x256xf32>, vector<256x512xf32>, vector<8x512xf32> -> vector<8x512xf32>
    %c0_9 = arith.constant 0 : index
    %c0_10 = arith.constant 0 : index
    %10 = vector.load %arg5[%c0_9, %c0_10] : memref<1x512xf32, #tpu.memory_space<vmem>>, vector<1x512xf32>
    %11 = vector.broadcast %10 : vector<1x512xf32> to vector<8x512xf32>
    %12 = arith.addf %9, %11 : vector<8x512xf32>
    %cst_11 = arith.constant 0.000000e+00 : f32
    %13 = vector.broadcast %cst_11 : f32 to vector<8x512xf32>
    %14 = arith.maximumf %12, %13 : vector<8x512xf32>
    %c0_12 = arith.constant 0 : index
    %c0_13 = arith.constant 0 : index
    %15 = vector.load %arg6[%c0_12, %c0_13] : memref<512x64xf32, #tpu.memory_space<vmem>>, vector<512x64xf32>
    %cst_14 = arith.constant dense<0.000000e+00> : vector<8x64xf32>
    %16 = tpu.matmul %14, %15, %cst_14 {dimension_numbers = #tpu.dot_dimension_numbers<[1], [0], [0], [1], [0, 0, 1, 1], [], []>} : vector<8x512xf32>, vector<512x64xf32>, vector<8x64xf32> -> vector<8x64xf32>
    %c0_15 = arith.constant 0 : index
    %c0_16 = arith.constant 0 : index
    %17 = vector.load %arg7[%c0_15, %c0_16] : memref<1x64xf32, #tpu.memory_space<vmem>>, vector<1x64xf32>
    %18 = vector.broadcast %17 : vector<1x64xf32> to vector<8x64xf32>
    %19 = arith.addf %16, %18 : vector<8x64xf32>
    %cst_17 = arith.constant 0.000000e+00 : f32
    %20 = vector.broadcast %cst_17 : f32 to vector<8x64xf32>
    %21 = arith.maximumf %19, %20 : vector<8x64xf32>
    %c0_18 = arith.constant 0 : index
    %c0_19 = arith.constant 0 : index
    %22 = vector.load %arg8[%c0_18, %c0_19] : memref<64x128xf32, #tpu.memory_space<vmem>>, vector<64x128xf32>
    %cst_20 = arith.constant dense<0.000000e+00> : vector<8x128xf32>
    %23 = tpu.matmul %21, %22, %cst_20 {dimension_numbers = #tpu.dot_dimension_numbers<[1], [0], [0], [1], [0, 0, 1, 1], [], []>} : vector<8x64xf32>, vector<64x128xf32>, vector<8x128xf32> -> vector<8x128xf32>
    %c0_21 = arith.constant 0 : index
    %c0_22 = arith.constant 0 : index
    %24 = vector.load %arg9[%c0_21, %c0_22] : memref<1x128xf32, #tpu.memory_space<vmem>>, vector<1x128xf32>
    %25 = vector.broadcast %24 : vector<1x128xf32> to vector<8x128xf32>
    %26 = arith.addf %23, %25 : vector<8x128xf32>
    %cst_23 = arith.constant dense<0xFF800000> : vector<8xf32>
    %27 = vector.multi_reduction <maximumf>, %26, %cst_23 [1] : vector<8x128xf32> to vector<8xf32>
    %28 = vector.shape_cast %27 : vector<8xf32> to vector<8x1xf32>
    %29 = vector.broadcast %28 : vector<8x1xf32> to vector<8x128xf32>
    %30 = arith.subf %26, %29 : vector<8x128xf32>
    %31 = math.exp %30 : vector<8x128xf32>
    %cst_24 = arith.constant dense<0.000000e+00> : vector<8xf32>
    %32 = vector.multi_reduction <add>, %31, %cst_24 [1] : vector<8x128xf32> to vector<8xf32>
    %33 = vector.shape_cast %32 : vector<8xf32> to vector<8x1xf32>
    %34 = tpu.reciprocal %33 {approx = true} : vector<8x1xf32> -> vector<8x1xf32>
    %35 = vector.broadcast %34 : vector<8x1xf32> to vector<8x128xf32>
    %36 = arith.mulf %31, %35 : vector<8x128xf32>
    %c0_25 = arith.constant 0 : index
    %c0_26 = arith.constant 0 : index
    %37 = vector.load %arg10[%c0_25, %c0_26] : memref<8x128xf32, #tpu.memory_space<vmem>>, vector<8x128xf32>
    tpu.vector_store %arg10[%c0_25, %c0_26], %36 {strides = array<i32>} : memref<8x128xf32, #tpu.memory_space<vmem>>, vector<8x128xf32>,
    return
  }
  func.func @transform_0(%arg0: i32) -> (i32, i32) {
    %c0_i32 = arith.constant 0 : i32
    %c0_i32_0 = arith.constant 0 : i32
    return %arg0, %c0_i32 : i32, i32
  }
  func.func @transform_1(%arg0: i32) -> (i32, i32) {
    %c0_i32 = arith.constant 0 : i32
    %c0_i32_0 = arith.constant 0 : i32
    %c0_i32_1 = arith.constant 0 : i32
    return %c0_i32, %c0_i32_0 : i32, i32
  }
  func.func @transform_2(%arg0: i32) -> (i32, i32) {
    %c0_i32 = arith.constant 0 : i32
    %c0_i32_0 = arith.constant 0 : i32
    %c0_i32_1 = arith.constant 0 : i32
    return %c0_i32, %c0_i32_0 : i32, i32
  }
  func.func @transform_3(%arg0: i32) -> (i32, i32) {
    %c0_i32 = arith.constant 0 : i32
    %c0_i32_0 = arith.constant 0 : i32
    %c0_i32_1 = arith.constant 0 : i32
    return %c0_i32, %c0_i32_0 : i32, i32
  }
  func.func @transform_4(%arg0: i32) -> (i32, i32) {
    %c0_i32 = arith.constant 0 : i32
    %c0_i32_0 = arith.constant 0 : i32
    %c0_i32_1 = arith.constant 0 : i32
    return %c0_i32, %c0_i32_0 : i32, i32
  }
  func.func @transform_5(%arg0: i32) -> (i32, i32) {
    %c0_i32 = arith.constant 0 : i32
    %c0_i32_0 = arith.constant 0 : i32
    %c0_i32_1 = arith.constant 0 : i32
    return %c0_i32, %c0_i32_0 : i32, i32
  }
  func.func @transform_6(%arg0: i32) -> (i32, i32) {
    %c0_i32 = arith.constant 0 : i32
    %c0_i32_0 = arith.constant 0 : i32
    %c0_i32_1 = arith.constant 0 : i32
    return %c0_i32, %c0_i32_0 : i32, i32
  }
  func.func @transform_7(%arg0: i32) -> (i32, i32) {
    %c0_i32 = arith.constant 0 : i32
    %c0_i32_0 = arith.constant 0 : i32
    %c0_i32_1 = arith.constant 0 : i32
    return %c0_i32, %c0_i32_0 : i32, i32
  }
  func.func @transform_8(%arg0: i32) -> (i32, i32) {
    %c0_i32 = arith.constant 0 : i32
    %c0_i32_0 = arith.constant 0 : i32
    %c0_i32_1 = arith.constant 0 : i32
    return %c0_i32, %c0_i32_0 : i32, i32
  }
  func.func @transform_9(%arg0: i32) -> (i32, i32) {
    %c0_i32 = arith.constant 0 : i32
    %c0_i32_0 = arith.constant 0 : i32
    return %arg0, %c0_i32 : i32, i32
  }
}

</mosaic_0001>

<llo_original>
// kernel: tpu_custom_call.1
$region0: #{tpu_custom_call.1}
  #allocation0 [shape = 'u32[]', space=smem, size = 0x4, offset = 0x4, fixed_abs, tag = 'smem constant byte address 0x4 - core index']
  #allocation1 [shape = 'u32[144,128]{1,0:T(1,128)}', space=vmem, size = 0x12000, scoped, tag = 'internal scratch']
  %s0 = inlined_call_operand.vmem [shape: f32[8,176], index: 0, kind: input, shape index: {}]
  %s1 = inlined_call_operand.vmem [shape: f32[176,256], index: 1, kind: input, shape index: {}]
  %s2 = inlined_call_operand.vmem [shape: f32[1,256], index: 2, kind: input, shape index: {}]
  %s3 = inlined_call_operand.hbm [shape: f32[256,512], index: 3, kind: input, shape index: {}]
  %s4 = inlined_call_operand.vmem [shape: f32[1,512], index: 4, kind: input, shape index: {}]
  %s5 = inlined_call_operand.vmem [shape: f32[512,64], index: 5, kind: input, shape index: {}]
  %s6 = inlined_call_operand.vmem [shape: f32[1,64], index: 6, kind: input, shape index: {}]
  %s7 = inlined_call_operand.vmem [shape: f32[64,128], index: 7, kind: input, shape index: {}]
  %s8 = inlined_call_operand.vmem [shape: f32[1,128], index: 8, kind: input, shape index: {}]
  %s9 = inlined_call_operand.hbm [shape: f32[8,128], index: 9, kind: output, shape index: {}]
  %s10 = sld [smem:[#allocation0]]
  $region50: #{tpu_custom_call.1} parent=0
    _
  %s12 = ssub.s32 1, %s10
  %s13 = scalar_select 0, %s12, %s10
  $region1: #{tpu_custom_call.1} parent=0
    #allocation2 [shape = 'u8[524288]{0}', space=vmem, size = 0x80000, scoped, tag = 'input window, operand 3, single buffered']
    #allocation3 [shape = 's32[1]{0}', space=sflag, size = 0x4, scoped, tag = 'scoped memory for tpu_custom_call.1']
    #allocation4 [shape = 's32[1]{0}', space=sflag, size = 0x4, scoped, tag = 'scoped memory for tpu_custom_call.1']
    #allocation5 [shape = 'u8[4096]{0}', space=vmem, size = 0x1000, scoped, tag = 'output window, operand 0, single buffered']
    %14 = vsyncpa [#allocation3], 0
    %15 = vsyncpa [#allocation4], 0
    // Predicated region
    $region2: #{tpu_custom_call.1} parent=1 // pred_check
      _
    $region3: #{tpu_custom_call.1} parent=1 // pred_check_branch
      %17 = sbr.rel (0) target = $region5
    $region4: #{tpu_custom_call.1} parent=1 // pred_region
      _
    $region5: #{tpu_custom_call.1} parent=1 // pred_fallthru
      _
    // Predicated region
    $region6: #{tpu_custom_call.1} parent=1 // pred_check
      _
    $region7: #{tpu_custom_call.1} parent=1 // pred_check_branch
      %19 = sbr.rel (0) target = $region9
    $region8: #{tpu_custom_call.1} parent=1 // pred_region
      _
    $region9: #{tpu_custom_call.1} parent=1 // pred_fallthru
      _
    // Predicated region
    $region10: #{tpu_custom_call.1} parent=1 // pred_check
      _
    $region11: #{tpu_custom_call.1} parent=1 // pred_check_branch
      %21 = sbr.rel (0) target = $region13
    $region12: #{tpu_custom_call.1} parent=1 // pred_region
      _
    $region13: #{tpu_custom_call.1} parent=1 // pred_fallthru
      _
    // Predicated region
    $region14: #{tpu_custom_call.1} parent=1 // pred_check
      _
    $region15: #{tpu_custom_call.1} parent=1 // pred_check_branch
      %23 = sbr.rel (0) target = $region17
    $region16: #{tpu_custom_call.1} parent=1 // pred_region
      %s25 = ssub.s32 16384, 16384
      %26 = vsyncadd [#allocation3], %s25
      %s27 = sshll.u32 [#allocation2], 4
      %s28 = int_to_ptr.vmem [resolvable:$true] %s27
      %33 = dma.hbm_to_vmem [thread:$0]  %s3, 16384, %s28, [#allocation3], 512, 512, 32
    $region17: #{tpu_custom_call.1} parent=1 // pred_fallthru
      _
    // Predicated region
    $region18: #{tpu_custom_call.1} parent=1 // pred_check
      _
    $region19: #{tpu_custom_call.1} parent=1 // pred_check_branch
      %35 = sbr.rel (0) target = $region21
    $region20: #{tpu_custom_call.1} parent=1 // pred_region
      _
    $region21: #{tpu_custom_call.1} parent=1 // pred_fallthru
      _
    // Predicated region
    $region22: #{tpu_custom_call.1} parent=1 // pred_check
      _
    $region23: #{tpu_custom_call.1} parent=1 // pred_check_branch
      %37 = sbr.rel (0) target = $region25
    $region24: #{tpu_custom_call.1} parent=1 // pred_region
      _
    $region25: #{tpu_custom_call.1} parent=1 // pred_fallthru
      _
    // Predicated region
    $region26: #{tpu_custom_call.1} parent=1 // pred_check
      _
    $region27: #{tpu_custom_call.1} parent=1 // pred_check_branch
      %39 = sbr.rel (0) target = $region29
    $region28: #{tpu_custom_call.1} parent=1 // pred_region
      _
    $region29: #{tpu_custom_call.1} parent=1 // pred_fallthru
      _
    // Predicated region
    $region30: #{tpu_custom_call.1} parent=1 // pred_check
      _
    $region31: #{tpu_custom_call.1} parent=1 // pred_check_branch
      %41 = sbr.rel (0) target = $region33
    $region32: #{tpu_custom_call.1} parent=1 // pred_region
      _
    $region33: #{tpu_custom_call.1} parent=1 // pred_fallthru
      _
    // Predicated region
    $region34: #{tpu_custom_call.1} parent=1 // pred_check
      _
    $region35: #{tpu_custom_call.1} parent=1 // pred_check_branch
      %43 = sbr.rel (0) target = $region37
    $region36: #{tpu_custom_call.1} parent=1 // pred_region
      _
    $region37: #{tpu_custom_call.1} parent=1 // pred_fallthru
      _
    // Predicated region
    $region38: #{tpu_custom_call.1} parent=1 // pred_check
      _
    $region39: #{tpu_custom_call.1} parent=1 // pred_check_branch
      %45 = sbr.rel (0) target = $region41
    $region40: #{tpu_custom_call.1} parent=1 // pred_region
      %46 = dma.done [#allocation3], 16384
    $region41: #{tpu_custom_call.1} parent=1 // pred_fallthru
      _
    %v47 = vld [vmem:[%s0] sm:$0xff]
    %v48 = vld [vmem:[%s0 + $0x8] sm:$0xff]
    %v49 = vld [vmem:[%s1] sm:$0xff]
    %v50 = vld [vmem:[%s1 + $0x8] sm:$0xff]
    %v51 = vld [vmem:[%s1 + $0x10] sm:$0xff]
    %v52 = vld [vmem:[%s1 + $0x18] sm:$0xff]
    %v53 = vld [vmem:[%s1 + $0x20] sm:$0xff]
    %v54 = vld [vmem:[%s1 + $0x28] sm:$0xff]
    %v55 = vld [vmem:[%s1 + $0x30] sm:$0xff]
    %v56 = vld [vmem:[%s1 + $0x38] sm:$0xff]
    %v57 = vld [vmem:[%s1 + $0x40] sm:$0xff]
    %v58 = vld [vmem:[%s1 + $0x48] sm:$0xff]
    %v59 = vld [vmem:[%s1 + $0x50] sm:$0xff]
    %v60 = vld [vmem:[%s1 + $0x58] sm:$0xff]
    %v61 = vld [vmem:[%s1 + $0x60] sm:$0xff]
    %v62 = vld [vmem:[%s1 + $0x68] sm:$0xff]
    %v63 = vld [vmem:[%s1 + $0x70] sm:$0xff]
    %v64 = vld [vmem:[%s1 + $0x78] sm:$0xff]
    %v65 = vld [vmem:[%s1 + $0x80] sm:$0xff]
    %v66 = vld [vmem:[%s1 + $0x88] sm:$0xff]
    %v67 = vld [vmem:[%s1 + $0x90] sm:$0xff]
    %v68 = vld [vmem:[%s1 + $0x98] sm:$0xff]
    %v69 = vld [vmem:[%s1 + $0xa0] sm:$0xff]
    %v70 = vld [vmem:[%s1 + $0xa8] sm:$0xff]
    %v71 = vld [vmem:[%s1 + $0xb0] sm:$0xff]
    %v72 = vld [vmem:[%s1 + $0xb8] sm:$0xff]
    %v73 = vld [vmem:[%s1 + $0xc0] sm:$0xff]
    %v74 = vld [vmem:[%s1 + $0xc8] sm:$0xff]
    %v75 = vld [vmem:[%s1 + $0xd0] sm:$0xff]
    %v76 = vld [vmem:[%s1 + $0xd8] sm:$0xff]
    %v77 = vld [vmem:[%s1 + $0xe0] sm:$0xff]
    %v78 = vld [vmem:[%s1 + $0xe8] sm:$0xff]
    %v79 = vld [vmem:[%s1 + $0xf0] sm:$0xff]
    %v80 = vld [vmem:[%s1 + $0xf8] sm:$0xff]
    %v81 = vld [vmem:[%s1 + $0x100] sm:$0xff]
    %v82 = vld [vmem:[%s1 + $0x108] sm:$0xff]
    %v83 = vld [vmem:[%s1 + $0x110] sm:$0xff]
    %v84 = vld [vmem:[%s1 + $0x118] sm:$0xff]
    %v85 = vld [vmem:[%s1 + $0x120] sm:$0xff]
    %v86 = vld [vmem:[%s1 + $0x128] sm:$0xff]
    %v87 = vld [vmem:[%s1 + $0x130] sm:$0xff]
    %v88 = vld [vmem:[%s1 + $0x138] sm:$0xff]
    %v89 = vld [vmem:[%s1 + $0x140] sm:$0xff]
    %v90 = vld [vmem:[%s1 + $0x148] sm:$0xff]
    %v91 = vld [vmem:[%s1 + $0x150] sm:$0xff]
    %v92 = vld [vmem:[%s1 + $0x158] sm:$0xff]
    %v93 = vld [vmem:[%s2] sm:$0x3]
    %v95 = vlaneseq
    %v96 = vshrl.u32 %v95, 7
    %v97 = vsub.s32 0, %v96
    %v98 = vrot.slane %v93, %v97
    %v99 = vlaneseq
    %v100 = vshrl.u32 %v99, 7
    %v101 = vsub.s32 1, %v100
    %v102 = vrot.slane %v93, %v101
    %vm105 = vcmask 392192
    %v107 = vsel %vm105, %v48, 0
    %109 = vmatprep.subr.mxu0 %v50
    %110 = vmatpush1.msra.mxu0 %v49
    %111 = vmatprep.subr.mxu0 %v52
    %112 = vmatpush1.msra.mxu0 %v51
    %113 = vmatprep.subr.mxu0 %v54
    %114 = vmatpush1.msra.mxu0 %v53
    %115 = vmatprep.subr.mxu0 %v56
    %116 = vmatpush1.msra.mxu0 %v55
    %117 = vmatprep.subr.mxu0 %v58
    %118 = vmatpush1.msra.mxu0 %v57
    %119 = vmatprep.subr.mxu0 %v60
    %120 = vmatpush1.msra.mxu0 %v59
    %121 = vmatprep.subr.mxu0 %v62
    %122 = vmatpush1.msra.mxu0 %v61
    %123 = vmatprep.subr.mxu0 %v64
    %124 = vmatpush1.msra.mxu0 %v63
    %125 = vmatprep.subr.mxu0 %v66
    %126 = vmatpush1.msra.mxu0 %v65
    %127 = vmatprep.subr.mxu0 %v68
    %128 = vmatpush1.msra.mxu0 %v67
    %129 = vmatprep.subr.mxu0 %v70
    %130 = vmatpush1.msra.mxu0 %v69
    %131 = vmatprep.subr.mxu0 %v72
    %132 = vmatpush1.msra.mxu0 %v71
    %133 = vmatprep.subr.mxu0 %v74
    %134 = vmatpush1.msra.mxu0 %v73
    %135 = vmatprep.subr.mxu0 %v76
    %136 = vmatpush1.msra.mxu0 %v75
    %137 = vmatprep.subr.mxu0 %v78
    %138 = vmatpush1.msra.mxu0 %v77
    %139 = vmatprep.subr.mxu0 %v80
    %140 = vmatpush1.msra.mxu0 %v79
    %141 = vmatprep.subr.mxu0 %v82
    %142 = vmatpush1.msra.mxu0 %v81
    %143 = vmatprep.subr.mxu0 %v84
    %144 = vmatpush1.msra.mxu0 %v83
    %145 = vmatprep.subr.mxu0 %v86
    %146 = vmatpush1.msra.mxu0 %v85
    %147 = vmatprep.subr.mxu0 %v88
    %148 = vmatpush1.msra.mxu0 %v87
    %149 = vmatprep.subr.mxu0 %v90
    %150 = vmatpush1.msra.mxu0 %v89
    %151 = vmatprep.subr.mxu0 %v92
    %152 = vmatpush1.msra.mxu0 %v91
    %153 = vmatprep.subr.mxu0 0.0
    %154 = vmatpush1.msra.mxu0 0.0
    %155 = vmatprep.subr.mxu0 0.0
    %156 = vmatpush1.msra.mxu0 0.0
    %157 = vmatprep.subr.mxu0 0.0
    %158 = vmatpush1.msra.mxu0 0.0
    %159 = vmatprep.subr.mxu0 0.0
    %160 = vmatpush1.msra.mxu0 0.0
    %161 = vmatprep.subr.mxu0 0.0
    %162 = vmatpush1.msra.mxu0 0.0
    %163 = vmatprep.subr.mxu0 0.0
    %164 = vmatpush1.msra.mxu0 0.0
    %165 = vmatprep.subr.mxu0 0.0
    %166 = vmatpush1.msra.mxu0 0.0
    %167 = vmatprep.subr.mxu0 0.0
    %168 = vmatpush1.msra.mxu0 0.0
    %169 = vmatprep.subr.mxu0 0.0
    %170 = vmatpush1.msra.mxu0 0.0
    %171 = vmatprep.subr.mxu0 0.0
    %172 = vmatpush1.msra.mxu0 0.0
    %173 = vmatprep.mubr.f32.mxu0 %v107
    %174 = vmatmul.mubr.f32.gmra.mrb[0].mxu0 %v47
    %v175 = vpop.f32.mrb[0].mxu0
    %v176 = vadd.f32 %v98, %v175
    %v177 = vpop.f32.mrb[0].mxu0
    %v178 = vadd.f32 %v102, %v177
    %179 = vdwg.mxu0
    %v180 = vmax.f32 %v176, 0.0
    %v181 = vmax.f32 %v178, 0.0
    %v182 = vld [vmem:[#allocation2] sm:$0xff]
    %v183 = vld [vmem:[#allocation2 + $0x8] sm:$0xff]
    %v184 = vld [vmem:[#allocation2 + $0x10] sm:$0xff]
    %v185 = vld [vmem:[#allocation2 + $0x18] sm:$0xff]
    %v186 = vld [vmem:[#allocation2 + $0x20] sm:$0xff]
    %v187 = vld [vmem:[#allocation2 + $0x28] sm:$0xff]
    %v188 = vld [vmem:[#allocation2 + $0x30] sm:$0xff]
    %v189 = vld [vmem:[#allocation2 + $0x38] sm:$0xff]
    %v190 = vld [vmem:[#allocation2 + $0x40] sm:$0xff]
    %v191 = vld [vmem:[#allocation2 + $0x48] sm:$0xff]
    %v192 = vld [vmem:[#allocation2 + $0x50] sm:$0xff]
    %v193 = vld [vmem:[#allocation2 + $0x58] sm:$0xff]
    %v194 = vld [vmem:[#allocation2 + $0x60] sm:$0xff]
    %v195 = vld [vmem:[#allocation2 + $0x68] sm:$0xff]
    %v196 = vld [vmem:[#allocation2 + $0x70] sm:$0xff]
    %v197 = vld [vmem:[#allocation2 + $0x78] sm:$0xff]
    %v198 = vld [vmem:[#allocation2 + $0x80] sm:$0xff]
    %v199 = vld [vmem:[#allocation2 + $0x88] sm:$0xff]
    %v200 = vld [vmem:[#allocation2 + $0x90] sm:$0xff]
    %v201 = vld [vmem:[#allocation2 + $0x98] sm:$0xff]
    %v202 = vld [vmem:[#allocation2 + $0xa0] sm:$0xff]
    %v203 = vld [vmem:[#allocation2 + $0xa8] sm:$0xff]
    %v204 = vld [vmem:[#allocation2 + $0xb0] sm:$0xff]
    %v205 = vld [vmem:[#allocation2 + $0xb8] sm:$0xff]
    %v206 = vld [vmem:[#allocation2 + $0xc0] sm:$0xff]
    %v207 = vld [vmem:[#allocation2 + $0xc8] sm:$0xff]
    %v208 = vld [vmem:[#allocation2 + $0xd0] sm:$0xff]
    %v209 = vld [vmem:[#allocation2 + $0xd8] sm:$0xff]
    %v210 = vld [vmem:[#allocation2 + $0xe0] sm:$0xff]
    %v211 = vld [vmem:[#allocation2 + $0xe8] sm:$0xff]
    %v212 = vld [vmem:[#allocation2 + $0xf0] sm:$0xff]
    %v213 = vld [vmem:[#allocation2 + $0xf8] sm:$0xff]
    %v214 = vld [vmem:[#allocation2 + $0x100] sm:$0xff]
    %v215 = vld [vmem:[#allocation2 + $0x108] sm:$0xff]
    %v216 = vld [vmem:[#allocation2 + $0x110] sm:$0xff]
    %v217 = vld [vmem:[#allocation2 + $0x118] sm:$0xff]
    %v218 = vld [vmem:[#allocation2 + $0x120] sm:$0xff]
    %v219 = vld [vmem:[#allocation2 + $0x128] sm:$0xff]
    %v220 = vld [vmem:[#allocation2 + $0x130] sm:$0xff]
    %v221 = vld [vmem:[#allocation2 + $0x138] sm:$0xff]
    %v222 = vld [vmem:[#allocation2 + $0x140] sm:$0xff]
    %v223 = vld [vmem:[#allocation2 + $0x148] sm:$0xff]
    %v224 = vld [vmem:[#allocation2 + $0x150] sm:$0xff]
    %v225 = vld [vmem:[#allocation2 + $0x158] sm:$0xff]
    %v226 = vld [vmem:[#allocation2 + $0x160] sm:$0xff]
    %v227 = vld [vmem:[#allocation2 + $0x168] sm:$0xff]
    %v228 = vld [vmem:[#allocation2 + $0x170] sm:$0xff]
    %v229 = vld [vmem:[#allocation2 + $0x178] sm:$0xff]
    %v230 = vld [vmem:[#allocation2 + $0x180] sm:$0xff]
    %v231 = vld [vmem:[#allocation2 + $0x188] sm:$0xff]
    %v232 = vld [vmem:[#allocation2 + $0x190] sm:$0xff]
    %v233 = vld [vmem:[#allocation2 + $0x198] sm:$0xff]
    %v234 = vld [vmem:[#allocation2 + $0x1a0] sm:$0xff]
    %v235 = vld [vmem:[#allocation2 + $0x1a8] sm:$0xff]
    %v236 = vld [vmem:[#allocation2 + $0x1b0] sm:$0xff]
    %v237 = vld [vmem:[#allocation2 + $0x1b8] sm:$0xff]
    %v238 = vld [vmem:[#allocation2 + $0x1c0] sm:$0xff]
    %v239 = vld [vmem:[#allocation2 + $0x1c8] sm:$0xff]
    %v240 = vld [vmem:[#allocation2 + $0x1d0] sm:$0xff]
    %v241 = vld [vmem:[#allocation2 + $0x1d8] sm:$0xff]
    %v242 = vld [vmem:[#allocation2 + $0x1e0] sm:$0xff]
    %v243 = vld [vmem:[#allocation2 + $0x1e8] sm:$0xff]
    %v244 = vld [vmem:[#allocation2 + $0x1f0] sm:$0xff]
    %v245 = vld [vmem:[#allocation2 + $0x1f8] sm:$0xff]
    %v246 = vld [vmem:[#allocation2 + $0x200] sm:$0xff]
    %v247 = vld [vmem:[#allocation2 + $0x208] sm:$0xff]
    %v248 = vld [vmem:[#allocation2 + $0x210] sm:$0xff]
    %v249 = vld [vmem:[#allocation2 + $0x218] sm:$0xff]
    %v250 = vld [vmem:[#allocation2 + $0x220] sm:$0xff]
    %v251 = vld [vmem:[#allocation2 + $0x228] sm:$0xff]
    %v252 = vld [vmem:[#allocation2 + $0x230] sm:$0xff]
    %v253 = vld [vmem:[#allocation2 + $0x238] sm:$0xff]
    %v254 = vld [vmem:[#allocation2 + $0x240] sm:$0xff]
    %v255 = vld [vmem:[#allocation2 + $0x248] sm:$0xff]
    %v256 = vld [vmem:[#allocation2 + $0x250] sm:$0xff]
    %v257 = vld [vmem:[#allocation2 + $0x258] sm:$0xff]
    %v258 = vld [vmem:[#allocation2 + $0x260] sm:$0xff]
    %v259 = vld [vmem:[#allocation2 + $0x268] sm:$0xff]
    %v260 = vld [vmem:[#allocation2 + $0x270] sm:$0xff]
    %v261 = vld [vmem:[#allocation2 + $0x278] sm:$0xff]
    %v262 = vld [vmem:[#allocation2 + $0x280] sm:$0xff]
    %v263 = vld [vmem:[#allocation2 + $0x288] sm:$0xff]
    %v264 = vld [vmem:[#allocation2 + $0x290] sm:$0xff]
    %v265 = vld [vmem:[#allocation2 + $0x298] sm:$0xff]
    %v266 = vld [vmem:[#allocation2 + $0x2a0] sm:$0xff]
    %v267 = vld [vmem:[#allocation2 + $0x2a8] sm:$0xff]
    %v268 = vld [vmem:[#allocation2 + $0x2b0] sm:$0xff]
    %v269 = vld [vmem:[#allocation2 + $0x2b8] sm:$0xff]
    %v270 = vld [vmem:[#allocation2 + $0x2c0] sm:$0xff]
    %v271 = vld [vmem:[#allocation2 + $0x2c8] sm:$0xff]
    %v272 = vld [vmem:[#allocation2 + $0x2d0] sm:$0xff]
    %v273 = vld [vmem:[#allocation2 + $0x2d8] sm:$0xff]
    %v274 = vld [vmem:[#allocation2 + $0x2e0] sm:$0xff]
    %v275 = vld [vmem:[#allocation2 + $0x2e8] sm:$0xff]
    %v276 = vld [vmem:[#allocation2 + $0x2f0] sm:$0xff]
    %v277 = vld [vmem:[#allocation2 + $0x2f8] sm:$0xff]
    %v278 = vld [vmem:[#allocation2 + $0x300] sm:$0xff]
    %v279 = vld [vmem:[#allocation2 + $0x308] sm:$0xff]
    %v280 = vld [vmem:[#allocation2 + $0x310] sm:$0xff]
    %v281 = vld [vmem:[#allocation2 + $0x318] sm:$0xff]
    %v282 = vld [vmem:[#allocation2 + $0x320] sm:$0xff]
    %v283 = vld [vmem:[#allocation2 + $0x328] sm:$0xff]
    %v284 = vld [vmem:[#allocation2 + $0x330] sm:$0xff]
    %v285 = vld [vmem:[#allocation2 + $0x338] sm:$0xff]
    %v286 = vld [vmem:[#allocation2 + $0x340] sm:$0xff]
    %v287 = vld [vmem:[#allocation2 + $0x348] sm:$0xff]
    %v288 = vld [vmem:[#allocation2 + $0x350] sm:$0xff]
    %v289 = vld [vmem:[#allocation2 + $0x358] sm:$0xff]
    %v290 = vld [vmem:[#allocation2 + $0x360] sm:$0xff]
    %v291 = vld [vmem:[#allocation2 + $0x368] sm:$0xff]
    %v292 = vld [vmem:[#allocation2 + $0x370] sm:$0xff]
    %v293 = vld [vmem:[#allocation2 + $0x378] sm:$0xff]
    %v294 = vld [vmem:[#allocation2 + $0x380] sm:$0xff]
    %v295 = vld [vmem:[#allocation2 + $0x388] sm:$0xff]
    %v296 = vld [vmem:[#allocation2 + $0x390] sm:$0xff]
    %v297 = vld [vmem:[#allocation2 + $0x398] sm:$0xff]
    %v298 = vld [vmem:[#allocation2 + $0x3a0] sm:$0xff]
    %v299 = vld [vmem:[#allocation2 + $0x3a8] sm:$0xff]
    %v300 = vld [vmem:[#allocation2 + $0x3b0] sm:$0xff]
    %v301 = vld [vmem:[#allocation2 + $0x3b8] sm:$0xff]
    %v302 = vld [vmem:[#allocation2 + $0x3c0] sm:$0xff]
    %v303 = vld [vmem:[#allocation2 + $0x3c8] sm:$0xff]
    %v304 = vld [vmem:[#allocation2 + $0x3d0] sm:$0xff]
    %v305 = vld [vmem:[#allocation2 + $0x3d8] sm:$0xff]
    %v306 = vld [vmem:[#allocation2 + $0x3e0] sm:$0xff]
    %v307 = vld [vmem:[#allocation2 + $0x3e8] sm:$0xff]
    %v308 = vld [vmem:[#allocation2 + $0x3f0] sm:$0xff]
    %v309 = vld [vmem:[#allocation2 + $0x3f8] sm:$0xff]
    %v310 = vld [vmem:[%s4] sm:$0xf]
    %v312 = vlaneseq
    %v313 = vshrl.u32 %v312, 7
    %v314 = vsub.s32 0, %v313
    %v315 = vrot.slane %v310, %v314
    %v316 = vlaneseq
    %v317 = vshrl.u32 %v316, 7
    %v318 = vsub.s32 1, %v317
    %v319 = vrot.slane %v310, %v318
    %v320 = vlaneseq
    %v321 = vshrl.u32 %v320, 7
    %v322 = vsub.s32 2, %v321
    %v323 = vrot.slane %v310, %v322
    %v324 = vlaneseq
    %v325 = vshrl.u32 %v324, 7
    %v326 = vsub.s32 3, %v325
    %v327 = vrot.slane %v310, %v326
    %332 = vmatprep.subr.mxu0 %v183
    %333 = vmatpush1.msra.mxu0 %v182
    %334 = vmatprep.subr.mxu0 %v187
    %335 = vmatpush1.msra.mxu0 %v186
    %336 = vmatprep.subr.mxu0 %v191
    %337 = vmatpush1.msra.mxu0 %v190
    %338 = vmatprep.subr.mxu0 %v195
    %339 = vmatpush1.msra.mxu0 %v194
    %340 = vmatprep.subr.mxu0 %v199
    %341 = vmatpush1.msra.mxu0 %v198
    %342 = vmatprep.subr.mxu0 %v203
    %343 = vmatpush1.msra.mxu0 %v202
    %344 = vmatprep.subr.mxu0 %v207
    %345 = vmatpush1.msra.mxu0 %v206
    %346 = vmatprep.subr.mxu0 %v211
    %347 = vmatpush1.msra.mxu0 %v210
    %348 = vmatprep.subr.mxu0 %v215
    %349 = vmatpush1.msra.mxu0 %v214
    %350 = vmatprep.subr.mxu0 %v219
    %351 = vmatpush1.msra.mxu0 %v218
    %352 = vmatprep.subr.mxu0 %v223
    %353 = vmatpush1.msra.mxu0 %v222
    %354 = vmatprep.subr.mxu0 %v227
    %355 = vmatpush1.msra.mxu0 %v226
    %356 = vmatprep.subr.mxu0 %v231
    %357 = vmatpush1.msra.mxu0 %v230
    %358 = vmatprep.subr.mxu0 %v235
    %359 = vmatpush1.msra.mxu0 %v234
    %360 = vmatprep.subr.mxu0 %v239
    %361 = vmatpush1.msra.mxu0 %v238
    %362 = vmatprep.subr.mxu0 %v243
    %363 = vmatpush1.msra.mxu0 %v242
    %364 = vmatprep.subr.mxu0 %v247
    %365 = vmatpush1.msra.mxu0 %v246
    %366 = vmatprep.subr.mxu0 %v251
    %367 = vmatpush1.msra.mxu0 %v250
    %368 = vmatprep.subr.mxu0 %v255
    %369 = vmatpush1.msra.mxu0 %v254
    %370 = vmatprep.subr.mxu0 %v259
    %371 = vmatpush1.msra.mxu0 %v258
    %372 = vmatprep.subr.mxu0 %v263
    %373 = vmatpush1.msra.mxu0 %v262
    %374 = vmatprep.subr.mxu0 %v267
    %375 = vmatpush1.msra.mxu0 %v266
    %376 = vmatprep.subr.mxu0 %v271
    %377 = vmatpush1.msra.mxu0 %v270
    %378 = vmatprep.subr.mxu0 %v275
    %379 = vmatpush1.msra.mxu0 %v274
    %380 = vmatprep.subr.mxu0 %v279
    %381 = vmatpush1.msra.mxu0 %v278
    %382 = vmatprep.subr.mxu0 %v283
    %383 = vmatpush1.msra.mxu0 %v282
    %384 = vmatprep.subr.mxu0 %v287
    %385 = vmatpush1.msra.mxu0 %v286
    %386 = vmatprep.subr.mxu0 %v291
    %387 = vmatpush1.msra.mxu0 %v290
    %388 = vmatprep.subr.mxu0 %v295
    %389 = vmatpush1.msra.mxu0 %v294
    %390 = vmatprep.subr.mxu0 %v299
    %391 = vmatpush1.msra.mxu0 %v298
    %392 = vmatprep.subr.mxu0 %v303
    %393 = vmatpush1.msra.mxu0 %v302
    %394 = vmatprep.subr.mxu0 %v307
    %395 = vmatpush1.msra.mxu0 %v306
    %396 = vmatprep.mubr.f32.mxu0 %v181
    %397 = vmatmul.mubr.f32.gmra.mrb[0].mxu0 %v180
    %v398 = vpop.f32.mrb[0].mxu0
    %v399 = vadd.f32 %v315, %v398
    %v400 = vpop.f32.mrb[0].mxu0
    %v401 = vadd.f32 %v319, %v400
    %402 = vdwg.mxu0
    %403 = vmatprep.subr.mxu0 %v185
    %404 = vmatpush1.msra.mxu0 %v184
    %405 = vmatprep.subr.mxu0 %v189
    %406 = vmatpush1.msra.mxu0 %v188
    %407 = vmatprep.subr.mxu0 %v193
    %408 = vmatpush1.msra.mxu0 %v192
    %409 = vmatprep.subr.mxu0 %v197
    %410 = vmatpush1.msra.mxu0 %v196
    %411 = vmatprep.subr.mxu0 %v201
    %412 = vmatpush1.msra.mxu0 %v200
    %413 = vmatprep.subr.mxu0 %v205
    %414 = vmatpush1.msra.mxu0 %v204
    %415 = vmatprep.subr.mxu0 %v209
    %416 = vmatpush1.msra.mxu0 %v208
    %417 = vmatprep.subr.mxu0 %v213
    %418 = vmatpush1.msra.mxu0 %v212
    %419 = vmatprep.subr.mxu0 %v217
    %420 = vmatpush1.msra.mxu0 %v216
    %421 = vmatprep.subr.mxu0 %v221
    %422 = vmatpush1.msra.mxu0 %v220
    %423 = vmatprep.subr.mxu0 %v225
    %424 = vmatpush1.msra.mxu0 %v224
    %425 = vmatprep.subr.mxu0 %v229
    %426 = vmatpush1.msra.mxu0 %v228
    %427 = vmatprep.subr.mxu0 %v233
    %428 = vmatpush1.msra.mxu0 %v232
    %429 = vmatprep.subr.mxu0 %v237
    %430 = vmatpush1.msra.mxu0 %v236
    %431 = vmatprep.subr.mxu0 %v241
    %432 = vmatpush1.msra.mxu0 %v240
    %433 = vmatprep.subr.mxu0 %v245
    %434 = vmatpush1.msra.mxu0 %v244
    %435 = vmatprep.subr.mxu0 %v249
    %436 = vmatpush1.msra.mxu0 %v248
    %437 = vmatprep.subr.mxu0 %v253
    %438 = vmatpush1.msra.mxu0 %v252
    %439 = vmatprep.subr.mxu0 %v257
    %440 = vmatpush1.msra.mxu0 %v256
    %441 = vmatprep.subr.mxu0 %v261
    %442 = vmatpush1.msra.mxu0 %v260
    %443 = vmatprep.subr.mxu0 %v265
    %444 = vmatpush1.msra.mxu0 %v264
    %445 = vmatprep.subr.mxu0 %v269
    %446 = vmatpush1.msra.mxu0 %v268
    %447 = vmatprep.subr.mxu0 %v273
    %448 = vmatpush1.msra.mxu0 %v272
    %449 = vmatprep.subr.mxu0 %v277
    %450 = vmatpush1.msra.mxu0 %v276
    %451 = vmatprep.subr.mxu0 %v281
    %452 = vmatpush1.msra.mxu0 %v280
    %453 = vmatprep.subr.mxu0 %v285
    %454 = vmatpush1.msra.mxu0 %v284
    %455 = vmatprep.subr.mxu0 %v289
    %456 = vmatpush1.msra.mxu0 %v288
    %457 = vmatprep.subr.mxu0 %v293
    %458 = vmatpush1.msra.mxu0 %v292
    %459 = vmatprep.subr.mxu0 %v297
    %460 = vmatpush1.msra.mxu0 %v296
    %461 = vmatprep.subr.mxu0 %v301
    %462 = vmatpush1.msra.mxu0 %v300
    %463 = vmatprep.subr.mxu0 %v305
    %464 = vmatpush1.msra.mxu0 %v304
    %465 = vmatprep.subr.mxu0 %v309
    %466 = vmatpush1.msra.mxu0 %v308
    %467 = vmatprep.mubr.f32.mxu0 %v181
    %468 = vmatmul.mubr.f32.gmra.mrb[0].mxu0 %v180
    %v469 = vpop.f32.mrb[0].mxu0
    %v470 = vadd.f32 %v323, %v469
    %v471 = vpop.f32.mrb[0].mxu0
    %v472 = vadd.f32 %v327, %v471
    %473 = vdwg.mxu0
    %v474 = vmax.f32 %v399, 0.0
    %v475 = vmax.f32 %v401, 0.0
    %v476 = vmax.f32 %v470, 0.0
    %v477 = vmax.f32 %v472, 0.0
    %v478 = vld [vmem:[%s5] sm:$0xff]
    %v479 = vld [vmem:[%s5 + $0x8] sm:$0xff]
    %v480 = vld [vmem:[%s5 + $0x10] sm:$0xff]
    %v481 = vld [vmem:[%s5 + $0x18] sm:$0xff]
    %v482 = vld [vmem:[%s5 + $0x20] sm:$0xff]
    %v483 = vld [vmem:[%s5 + $0x28] sm:$0xff]
    %v484 = vld [vmem:[%s5 + $0x30] sm:$0xff]
    %v485 = vld [vmem:[%s5 + $0x38] sm:$0xff]
    %v486 = vld [vmem:[%s5 + $0x40] sm:$0xff]
    %v487 = vld [vmem:[%s5 + $0x48] sm:$0xff]
    %v488 = vld [vmem:[%s5 + $0x50] sm:$0xff]
    %v489 = vld [vmem:[%s5 + $0x58] sm:$0xff]
    %v490 = vld [vmem:[%s5 + $0x60] sm:$0xff]
    %v491 = vld [vmem:[%s5 + $0x68] sm:$0xff]
    %v492 = vld [vmem:[%s5 + $0x70] sm:$0xff]
    %v493 = vld [vmem:[%s5 + $0x78] sm:$0xff]
    %v494 = vld [vmem:[%s5 + $0x80] sm:$0xff]
    %v495 = vld [vmem:[%s5 + $0x88] sm:$0xff]
    %v496 = vld [vmem:[%s5 + $0x90] sm:$0xff]
    %v497 = vld [vmem:[%s5 + $0x98] sm:$0xff]
    %v498 = vld [vmem:[%s5 + $0xa0] sm:$0xff]
    %v499 = vld [vmem:[%s5 + $0xa8] sm:$0xff]
    %v500 = vld [vmem:[%s5 + $0xb0] sm:$0xff]
    %v501 = vld [vmem:[%s5 + $0xb8] sm:$0xff]
    %v502 = vld [vmem:[%s5 + $0xc0] sm:$0xff]
    %v503 = vld [vmem:[%s5 + $0xc8] sm:$0xff]
    %v504 = vld [vmem:[%s5 + $0xd0] sm:$0xff]
    %v505 = vld [vmem:[%s5 + $0xd8] sm:$0xff]
    %v506 = vld [vmem:[%s5 + $0xe0] sm:$0xff]
    %v507 = vld [vmem:[%s5 + $0xe8] sm:$0xff]
    %v508 = vld [vmem:[%s5 + $0xf0] sm:$0xff]
    %v509 = vld [vmem:[%s5 + $0xf8] sm:$0xff]
    %v510 = vld [vmem:[%s5 + $0x100] sm:$0xff]
    %v511 = vld [vmem:[%s5 + $0x108] sm:$0xff]
    %v512 = vld [vmem:[%s5 + $0x110] sm:$0xff]
    %v513 = vld [vmem:[%s5 + $0x118] sm:$0xff]
    %v514 = vld [vmem:[%s5 + $0x120] sm:$0xff]
    %v515 = vld [vmem:[%s5 + $0x128] sm:$0xff]
    %v516 = vld [vmem:[%s5 + $0x130] sm:$0xff]
    %v517 = vld [vmem:[%s5 + $0x138] sm:$0xff]
    %v518 = vld [vmem:[%s5 + $0x140] sm:$0xff]
    %v519 = vld [vmem:[%s5 + $0x148] sm:$0xff]
    %v520 = vld [vmem:[%s5 + $0x150] sm:$0xff]
    %v521 = vld [vmem:[%s5 + $0x158] sm:$0xff]
    %v522 = vld [vmem:[%s5 + $0x160] sm:$0xff]
    %v523 = vld [vmem:[%s5 + $0x168] sm:$0xff]
    %v524 = vld [vmem:[%s5 + $0x170] sm:$0xff]
    %v525 = vld [vmem:[%s5 + $0x178] sm:$0xff]
    %v526 = vld [vmem:[%s5 + $0x180] sm:$0xff]
    %v527 = vld [vmem:[%s5 + $0x188] sm:$0xff]
    %v528 = vld [vmem:[%s5 + $0x190] sm:$0xff]
    %v529 = vld [vmem:[%s5 + $0x198] sm:$0xff]
    %v530 = vld [vmem:[%s5 + $0x1a0] sm:$0xff]
    %v531 = vld [vmem:[%s5 + $0x1a8] sm:$0xff]
    %v532 = vld [vmem:[%s5 + $0x1b0] sm:$0xff]
    %v533 = vld [vmem:[%s5 + $0x1b8] sm:$0xff]
    %v534 = vld [vmem:[%s5 + $0x1c0] sm:$0xff]
    %v535 = vld [vmem:[%s5 + $0x1c8] sm:$0xff]
    %v536 = vld [vmem:[%s5 + $0x1d0] sm:$0xff]
    %v537 = vld [vmem:[%s5 + $0x1d8] sm:$0xff]
    %v538 = vld [vmem:[%s5 + $0x1e0] sm:$0xff]
    %v539 = vld [vmem:[%s5 + $0x1e8] sm:$0xff]
    %v540 = vld [vmem:[%s5 + $0x1f0] sm:$0xff]
    %v541 = vld [vmem:[%s5 + $0x1f8] sm:$0xff]
    %v542 = vld [vmem:[%s6] sm:$0x1]
    %v544 = vlaneseq
    %v545 = vshrl.u32 %v544, 7
    %v546 = vsub.s32 0, %v545
    %v547 = vrot.slane %v542, %v546
    %549 = vmatprep.subr.mxu0 0.0
    %550 = vmatpush1.msra.mxu0 %v478
    %551 = vmatprep.subr.mxu0 0.0
    %552 = vmatpush1.msra.mxu0 %v479
    %553 = vmatprep.subr.mxu0 0.0
    %554 = vmatpush1.msra.mxu0 %v480
    %555 = vmatprep.subr.mxu0 0.0
    %556 = vmatpush1.msra.mxu0 %v481
    %557 = vmatprep.subr.mxu0 0.0
    %558 = vmatpush1.msra.mxu0 %v482
    %559 = vmatprep.subr.mxu0 0.0
    %560 = vmatpush1.msra.mxu0 %v483
    %561 = vmatprep.subr.mxu0 0.0
    %562 = vmatpush1.msra.mxu0 %v484
    %563 = vmatprep.subr.mxu0 0.0
    %564 = vmatpush1.msra.mxu0 %v485
    %565 = vmatprep.subr.mxu0 0.0
    %566 = vmatpush1.msra.mxu0 %v486
    %567 = vmatprep.subr.mxu0 0.0
    %568 = vmatpush1.msra.mxu0 %v487
    %569 = vmatprep.subr.mxu0 0.0
    %570 = vmatpush1.msra.mxu0 %v488
    %571 = vmatprep.subr.mxu0 0.0
    %572 = vmatpush1.msra.mxu0 %v489
    %573 = vmatprep.subr.mxu0 0.0
    %574 = vmatpush1.msra.mxu0 %v490
    %575 = vmatprep.subr.mxu0 0.0
    %576 = vmatpush1.msra.mxu0 %v491
    %577 = vmatprep.subr.mxu0 0.0
    %578 = vmatpush1.msra.mxu0 %v492
    %579 = vmatprep.subr.mxu0 0.0
    %580 = vmatpush1.msra.mxu0 %v493
    %581 = vmatprep.subr.mxu0 0.0
    %582 = vmatpush1.msra.mxu0 %v494
    %583 = vmatprep.subr.mxu0 0.0
    %584 = vmatpush1.msra.mxu0 %v495
    %585 = vmatprep.subr.mxu0 0.0
    %586 = vmatpush1.msra.mxu0 %v496
    %587 = vmatprep.subr.mxu0 0.0
    %588 = vmatpush1.msra.mxu0 %v497
    %589 = vmatprep.subr.mxu0 0.0
    %590 = vmatpush1.msra.mxu0 %v498
    %591 = vmatprep.subr.mxu0 0.0
    %592 = vmatpush1.msra.mxu0 %v499
    %593 = vmatprep.subr.mxu0 0.0
    %594 = vmatpush1.msra.mxu0 %v500
    %595 = vmatprep.subr.mxu0 0.0
    %596 = vmatpush1.msra.mxu0 %v501
    %597 = vmatprep.subr.mxu0 0.0
    %598 = vmatpush1.msra.mxu0 %v502
    %599 = vmatprep.subr.mxu0 0.0
    %600 = vmatpush1.msra.mxu0 %v503
    %601 = vmatprep.subr.mxu0 0.0
    %602 = vmatpush1.msra.mxu0 %v504
    %603 = vmatprep.subr.mxu0 0.0
    %604 = vmatpush1.msra.mxu0 %v505
    %605 = vmatprep.subr.mxu0 0.0
    %606 = vmatpush1.msra.mxu0 %v506
    %607 = vmatprep.subr.mxu0 0.0
    %608 = vmatpush1.msra.mxu0 %v507
    %609 = vmatprep.subr.mxu0 0.0
    %610 = vmatpush1.msra.mxu0 %v508
    %611 = vmatprep.subr.mxu0 0.0
    %612 = vmatpush1.msra.mxu0 %v509
    %613 = vmatprep.mubr.f32.mxu0 %v475
    %614 = vmatmul.mubr.f32.gmra.mrb[0].mxu0 %v474
    %v615 = vpop.f32.mrb[0].mxu0
    %v616 = vadd.f32 %v547, %v615
    %v617 = vpop.f32.mrb[0].mxu0
    %618 = vdwg.mxu0
    %619 = vmatprep.subr.mxu0 0.0
    %620 = vmatpush1.msra.mxu0 %v510
    %621 = vmatprep.subr.mxu0 0.0
    %622 = vmatpush1.msra.mxu0 %v511
    %623 = vmatprep.subr.mxu0 0.0
    %624 = vmatpush1.msra.mxu0 %v512
    %625 = vmatprep.subr.mxu0 0.0
    %626 = vmatpush1.msra.mxu0 %v513
    %627 = vmatprep.subr.mxu0 0.0
    %628 = vmatpush1.msra.mxu0 %v514
    %629 = vmatprep.subr.mxu0 0.0
    %630 = vmatpush1.msra.mxu0 %v515
    %631 = vmatprep.subr.mxu0 0.0
    %632 = vmatpush1.msra.mxu0 %v516
    %633 = vmatprep.subr.mxu0 0.0
    %634 = vmatpush1.msra.mxu0 %v517
    %635 = vmatprep.subr.mxu0 0.0
    %636 = vmatpush1.msra.mxu0 %v518
    %637 = vmatprep.subr.mxu0 0.0
    %638 = vmatpush1.msra.mxu0 %v519
    %639 = vmatprep.subr.mxu0 0.0
    %640 = vmatpush1.msra.mxu0 %v520
    %641 = vmatprep.subr.mxu0 0.0
    %642 = vmatpush1.msra.mxu0 %v521
    %643 = vmatprep.subr.mxu0 0.0
    %644 = vmatpush1.msra.mxu0 %v522
    %645 = vmatprep.subr.mxu0 0.0
    %646 = vmatpush1.msra.mxu0 %v523
    %647 = vmatprep.subr.mxu0 0.0
    %648 = vmatpush1.msra.mxu0 %v524
    %649 = vmatprep.subr.mxu0 0.0
    %650 = vmatpush1.msra.mxu0 %v525
    %651 = vmatprep.subr.mxu0 0.0
    %652 = vmatpush1.msra.mxu0 %v526
    %653 = vmatprep.subr.mxu0 0.0
    %654 = vmatpush1.msra.mxu0 %v527
    %655 = vmatprep.subr.mxu0 0.0
    %656 = vmatpush1.msra.mxu0 %v528
    %657 = vmatprep.subr.mxu0 0.0
    %658 = vmatpush1.msra.mxu0 %v529
    %659 = vmatprep.subr.mxu0 0.0
    %660 = vmatpush1.msra.mxu0 %v530
    %661 = vmatprep.subr.mxu0 0.0
    %662 = vmatpush1.msra.mxu0 %v531
    %663 = vmatprep.subr.mxu0 0.0
    %664 = vmatpush1.msra.mxu0 %v532
    %665 = vmatprep.subr.mxu0 0.0
    %666 = vmatpush1.msra.mxu0 %v533
    %667 = vmatprep.subr.mxu0 0.0
    %668 = vmatpush1.msra.mxu0 %v534
    %669 = vmatprep.subr.mxu0 0.0
    %670 = vmatpush1.msra.mxu0 %v535
    %671 = vmatprep.subr.mxu0 0.0
    %672 = vmatpush1.msra.mxu0 %v536
    %673 = vmatprep.subr.mxu0 0.0
    %674 = vmatpush1.msra.mxu0 %v537
    %675 = vmatprep.subr.mxu0 0.0
    %676 = vmatpush1.msra.mxu0 %v538
    %677 = vmatprep.subr.mxu0 0.0
    %678 = vmatpush1.msra.mxu0 %v539
    %679 = vmatprep.subr.mxu0 0.0
    %680 = vmatpush1.msra.mxu0 %v540
    %681 = vmatprep.subr.mxu0 0.0
    %682 = vmatpush1.msra.mxu0 %v541
    %683 = vmatprep.mubr.f32.mxu0 %v477
    %684 = vmatmul.mubr.f32.gmra.mrb[0].mxu0 %v476
    %v685 = vpop.f32.mrb[0].mxu0
    %v686 = vadd.f32 %v616, %v685
    %v687 = vpop.f32.mrb[0].mxu0
    %688 = vdwg.mxu0
    %v689 = vmax.f32 %v686, 0.0
    %v690 = vld [vmem:[%s7] sm:$0xff]
    %v691 = vld [vmem:[%s7 + $0x8] sm:$0xff]
    %v692 = vld [vmem:[%s7 + $0x10] sm:$0xff]
    %v693 = vld [vmem:[%s7 + $0x18] sm:$0xff]
    %v694 = vld [vmem:[%s7 + $0x20] sm:$0xff]
    %v695 = vld [vmem:[%s7 + $0x28] sm:$0xff]
    %v696 = vld [vmem:[%s7 + $0x30] sm:$0xff]
    %v697 = vld [vmem:[%s7 + $0x38] sm:$0xff]
    %v698 = vld [vmem:[%s8] sm:$0x1]
    %v700 = vlaneseq
    %v701 = vshrl.u32 %v700, 7
    %v702 = vsub.s32 0, %v701
    %v703 = vrot.slane %v698, %v702
    %vm705 = vcmask 523264
    %v707 = vsel %vm705, %v689, 0
    %709 = vmatprep.subr.mxu0 0.0
    %710 = vmatpush1.msra.mxu0 %v690
    %711 = vmatprep.subr.mxu0 0.0
    %712 = vmatpush1.msra.mxu0 %v691
    %713 = vmatprep.subr.mxu0 0.0
    %714 = vmatpush1.msra.mxu0 %v692
    %715 = vmatprep.subr.mxu0 0.0
    %716 = vmatpush1.msra.mxu0 %v693
    %717 = vmatprep.subr.mxu0 0.0
    %718 = vmatpush1.msra.mxu0 %v694
    %719 = vmatprep.subr.mxu0 0.0
    %720 = vmatpush1.msra.mxu0 %v695
    %721 = vmatprep.subr.mxu0 0.0
    %722 = vmatpush1.msra.mxu0 %v696
    %723 = vmatprep.subr.mxu0 0.0
    %724 = vmatpush1.msra.mxu0 %v697
    %725 = vmatprep.subr.mxu0 0.0
    %726 = vmatpush1.msra.mxu0 0.0
    %727 = vmatprep.subr.mxu0 0.0
    %728 = vmatpush1.msra.mxu0 0.0
    %729 = vmatprep.subr.mxu0 0.0
    %730 = vmatpush1.msra.mxu0 0.0
    %731 = vmatprep.subr.mxu0 0.0
    %732 = vmatpush1.msra.mxu0 0.0
    %733 = vmatprep.subr.mxu0 0.0
    %734 = vmatpush1.msra.mxu0 0.0
    %735 = vmatprep.subr.mxu0 0.0
    %736 = vmatpush1.msra.mxu0 0.0
    %737 = vmatprep.subr.mxu0 0.0
    %738 = vmatpush1.msra.mxu0 0.0
    %739 = vmatprep.subr.mxu0 0.0
    %740 = vmatpush1.msra.mxu0 0.0
    %741 = vmatprep.subr.mxu0 0.0
    %742 = vmatpush1.msra.mxu0 0.0
    %743 = vmatprep.subr.mxu0 0.0
    %744 = vmatpush1.msra.mxu0 0.0
    %745 = vmatprep.subr.mxu0 0.0
    %746 = vmatpush1.msra.mxu0 0.0
    %747 = vmatprep.subr.mxu0 0.0
    %748 = vmatpush1.msra.mxu0 0.0
    %749 = vmatprep.subr.mxu0 0.0
    %750 = vmatpush1.msra.mxu0 0.0
    %751 = vmatprep.subr.mxu0 0.0
    %752 = vmatpush1.msra.mxu0 0.0
    %753 = vmatprep.subr.mxu0 0.0
    %754 = vmatpush1.msra.mxu0 0.0
    %755 = vmatprep.subr.mxu0 0.0
    %756 = vmatpush1.msra.mxu0 0.0
    %757 = vmatprep.subr.mxu0 0.0
    %758 = vmatpush1.msra.mxu0 0.0
    %759 = vmatprep.subr.mxu0 0.0
    %760 = vmatpush1.msra.mxu0 0.0
    %761 = vmatprep.subr.mxu0 0.0
    %762 = vmatpush1.msra.mxu0 0.0
    %763 = vmatprep.subr.mxu0 0.0
    %764 = vmatpush1.msra.mxu0 0.0
    %765 = vmatprep.subr.mxu0 0.0
    %766 = vmatpush1.msra.mxu0 0.0
    %767 = vmatprep.subr.mxu0 0.0
    %768 = vmatpush1.msra.mxu0 0.0
    %769 = vmatprep.subr.mxu0 0.0
    %770 = vmatpush1.msra.mxu0 0.0
    %771 = vmatprep.subr.mxu0 0.0
    %772 = vmatpush1.msra.mxu0 0.0
    %773 = vmatprep.mubr.f32.mxu0 0.0
    %774 = vmatmul.mubr.f32.gmra.mrb[0].mxu0 %v707
    %v775 = vpop.f32.mrb[0].mxu0
    %v776 = vadd.f32 %v703, %v775
    %v777 = vpop.f32.mrb[0].mxu0
    %778 = vdwg.mxu0
    %779 = vmax.xlane.f32.xlu0 %v776
    %v780 = vpop.xlane.xlu0 %779
    %v781 = vsub.f32 %v776, %v780
    %v782 = vmul.f32 %v781, 1.442695
    %v783 = vpow.pop %v782
    %784 = vadd.xlane.f32.xlu0 %v783
    %v785 = vpop.xlane.xlu0 %784
    %v786 = vrcp.pop %v785
    %v787 = vmul.f32 %v783, %v786
    %788 = vst [vmem:[#allocation5] sm:$0xff] %v787
    // Predicated region
    $region42: #{tpu_custom_call.1} parent=1 // pred_check
      _
    $region43: #{tpu_custom_call.1} parent=1 // pred_check_branch
      %790 = sbr.rel (0) target = $region45
    $region44: #{tpu_custom_call.1} parent=1 // pred_region
      %s792 = ssub.s32 128, 128
      %793 = vsyncadd [#allocation4], %s792
      %s795 = sshll.u32 [#allocation5], 4
      %s796 = int_to_ptr.vmem [resolvable:$true] %s795
      %798 = dma.vmem_to_hbm [thread:$0]  %s796, 128, %s9, [#allocation4]
    $region45: #{tpu_custom_call.1} parent=1 // pred_fallthru
      _
    // Predicated region
    $region46: #{tpu_custom_call.1} parent=1 // pred_check
      _
    $region47: #{tpu_custom_call.1} parent=1 // pred_check_branch
      %800 = sbr.rel (0) target = $region49
    $region48: #{tpu_custom_call.1} parent=1 // pred_region
      %801 = dma.done [#allocation4], 128
    $region49: #{tpu_custom_call.1} parent=1 // pred_fallthru
      _
    %802 = vsyncpa [#allocation3], 1
    %803 = vsyncpa [#allocation4], 1

</llo_original>
